<compile_context>
chip_gen: v6e
topology: v6e:2x2x1
jax: 0.10.0
libtpu: 0.0.40
codegen_flags: <defaults>
</compile_context>

<pallas_src>
import jax
import jax.numpy as jnp
from jax.experimental import pallas as pl
from jax.experimental.pallas import tpu as pltpu


def _linear_probe_kernel(state_ref, w_ref, b_ref, label_ref, out_ref, bce_ref):
    x = state_ref[...]                               # (TB, H), kept in input dtype
    w = w_ref[...].astype(x.dtype)                   # (H, 1), resident weight column
    b = b_ref[0, 0]                                  # scalar bias from SMEM (f32)
    y = label_ref[...].astype(jnp.float32)           # (TB, 1)

    # Linear layer on the MXU (f32 accumulate); output feature dim is 1.
    z = jnp.dot(x, w, preferred_element_type=jnp.float32) + b      # (TB, 1) logits

    # Stable sigmoid + softplus sharing a single EUP exp:
    #   e = exp(-|z|);  sigmoid(z)  = where(z>=0, 1, e) / (1+e)
    #   softplus(z)  = max(z, 0) + log(1+e);   softplus(-z) = softplus(z) - z
    e = jnp.exp(-jnp.abs(z))
    p = jnp.where(z >= 0, 1.0, e) / (1.0 + e)
    out_ref[...] = p.astype(out_ref.dtype)

    sp_pos = jnp.maximum(z, 0.0) + jnp.log(1.0 + e)  # softplus(z)
    sp_neg = sp_pos - z                              # softplus(-z)
    log_p = jnp.maximum(-sp_neg, -100.0)             # log(p),   PyTorch BCELoss clamp
    log_1mp = jnp.maximum(-sp_pos, -100.0)           # log(1-p), PyTorch BCELoss clamp
    bce_ref[...] = -(y * log_p + (1.0 - y) * log_1mp)


def _choose_batch_tile(batch, hidden):
    # Double-buffered f32 state tile must fit the scoped VMEM budget on all gens:
    # 2 * TB * H * 4 bytes <= ~24 MiB (headroom under the 32 MiB scoped limit).
    budget = 24 * 1024 * 1024
    tb = budget // (2 * max(hidden, 1) * 4)
    tb = max(8, min(1024, (tb // 8) * 8))            # 512-1024 rows at H~4k, mult of 8
    return min(tb, ((batch + 7) // 8) * 8)           # tiny batches: single small block


def linear_probe_forward(state, label, weight, bias, *, batch_tile=None):
    """state: (B, H); label: (B, 1); weight: (1, H); bias: (1, 1). Returns (prob, loss)."""
    B, H = state.shape
    TB = batch_tile if batch_tile is not None else _choose_batch_tile(B, H)
    TB = max(8, (TB // 8) * 8)
    num_tiles = (B + TB - 1) // TB
    B_pad = num_tiles * TB

    if B_pad != B:
        state = jnp.pad(state, ((0, B_pad - B), (0, 0)))
        label = jnp.pad(label, ((0, B_pad - B), (0, 0)))

    w_col = jnp.transpose(weight)                    # (H, 1): MXU-friendly layout
    bias_smem = bias.reshape(1, 1).astype(jnp.float32)
    label = label.astype(jnp.float32)

    out_pad, bce_pad = pl.pallas_call(
        _linear_probe_kernel,
        grid=(num_tiles,),
        in_specs=[
            pl.BlockSpec((TB, H), lambda i: (i, 0)),         # state: batch-tiled
            pl.BlockSpec((H, 1), lambda i: (0, 0)),          # weight: constant block, DMA'd once
            pl.BlockSpec(memory_space=pltpu.SMEM),           # bias: scalar path
            pl.BlockSpec((TB, 1), lambda i: (i, 0)),         # label: batch-tiled
        ],
        out_specs=(
            pl.BlockSpec((TB, 1), lambda i: (i, 0)),         # sigmoid probabilities
            pl.BlockSpec((TB, 1), lambda i: (i, 0)),         # per-row BCE terms
        ),
        out_shape=(
            jax.ShapeDtypeStruct((B_pad, 1), jnp.float32),
            jax.ShapeDtypeStruct((B_pad, 1), jnp.float32),
        ),
        compiler_params=pltpu.CompilerParams(
            dimension_semantics=("parallel",),               # independent batch tiles (v7x megacore)
            vmem_limit_bytes=32 * 1024 * 1024,
        ),
    )(state, w_col, bias_smem, label)

    out = out_pad[:B]
    # Finish the mean here; padded rows are sliced away so ragged tiles never
    # pollute the loss (keeps the batch axis parallel, no in-kernel accumulator).
    loss = jnp.sum(bce_pad[:B]) / B
    return out, loss


if __name__ == "__main__":
    B, H = 8, 32

    key = jax.random.PRNGKey(0)
    k_state, k_label, k_w, k_b = jax.random.split(key, 4)

    # nn.Linear-style init: U(-1/sqrt(H), 1/sqrt(H)).
    bound = 1.0 / (H ** 0.5)
    weight = jax.random.uniform(k_w, (1, H), jnp.float32, -bound, bound)
    bias = jax.random.uniform(k_b, (1, 1), jnp.float32, -bound, bound)

    state = jax.random.normal(k_state, (B, H), jnp.float32)
    label = jax.random.bernoulli(k_label, 0.5, (B, 1)).astype(jnp.float32)

    out, loss = linear_probe_forward(state, label, weight, bias)
    jax.block_until_ready((out, loss))

    # Pure-JAX reference (PyTorch semantics: sigmoid then BCELoss mean).
    ref_logits = state @ weight.T + bias[0, 0]
    ref_p = jax.nn.sigmoid(ref_logits)
    ref_loss = jnp.mean(
        -(label * jnp.log(ref_p) + (1.0 - label) * jnp.log(1.0 - ref_p))
    )
    assert jnp.allclose(out, ref_p, atol=1e-5), "out mismatch"
    assert abs(float(loss) - float(ref_loss)) < 1e-5, "loss mismatch"

    # Exercise the multi-tile + ragged-batch path (3 grid steps, padded rows
    # excluded from the mean by the wrapper slice).
    B2, H2 = 40, 128
    bound2 = 1.0 / (H2 ** 0.5)
    k_s2, k_l2 = jax.random.split(jax.random.PRNGKey(1), 2)
    weight2 = jax.random.uniform(k_w, (1, H2), jnp.float32, -bound2, bound2)
    state2 = jax.random.normal(k_s2, (B2, H2), jnp.float32)
    label2 = jax.random.bernoulli(k_l2, 0.5, (B2, 1)).astype(jnp.float32)

    out2, loss2 = linear_probe_forward(state2, label2, weight2, bias, batch_tile=16)
    jax.block_until_ready((out2, loss2))

    ref_logits2 = state2 @ weight2.T + bias[0, 0]
    ref_p2 = jax.nn.sigmoid(ref_logits2)
    ref_loss2 = jnp.mean(
        -(label2 * jnp.log(ref_p2) + (1.0 - label2) * jnp.log(1.0 - ref_p2))
    )
    assert jnp.allclose(out2, ref_p2, atol=1e-5), "out mismatch (tiled)"
    assert abs(float(loss2) - float(ref_loss2)) < 1e-5, "loss mismatch (tiled)"

    print("KERNEL_OK")
</pallas_src>

<mosaic_0001>
module attributes {stable_mosaic.version = 11 : i64} {
  func.func @_linear_probe_kernel(%arg0: i32, %arg1: memref<8x32xf32, #tpu.memory_space<vmem>>, %arg2: memref<32x1xf32, #tpu.memory_space<vmem>>, %arg3: memref<1x1xf32, #tpu.memory_space<smem>>, %arg4: memref<8x1xf32, #tpu.memory_space<vmem>>, %arg5: memref<8x1xf32, #tpu.memory_space<vmem>>, %arg6: memref<8x1xf32, #tpu.memory_space<vmem>>) attributes {dimension_semantics = [#tpu.dimension_semantics<parallel>], iteration_bounds = array<i64: 1>, scalar_prefetch = 0 : i64, scratch_operands = 0 : i64, tpu.core_type = #tpu.core_type<tc>, window_params = [{transform_indices = @transform_0, window_bounds = array<i64: 8, 32>}, {pipeline_mode = #tpu.pipeline_mode<synchronous>, transform_indices = @transform_1, window_bounds = array<i64: 32, 1>}, {transform_indices = @transform_2, window_bounds = array<i64: 1, 1>}, {transform_indices = @transform_3, window_bounds = array<i64: 8, 1>}, {transform_indices = @transform_4, window_bounds = array<i64: 8, 1>}, {transform_indices = @transform_5, window_bounds = array<i64: 8, 1>}]} {
    %c0 = arith.constant 0 : index
    %c0_0 = arith.constant 0 : index
    %0 = vector.load %arg1[%c0, %c0_0] : memref<8x32xf32, #tpu.memory_space<vmem>>, vector<8x32xf32>
    %c0_1 = arith.constant 0 : index
    %c0_2 = arith.constant 0 : index
    %1 = vector.load %arg2[%c0_1, %c0_2] : memref<32x1xf32, #tpu.memory_space<vmem>>, vector<32x1xf32>
    %c0_3 = arith.constant 0 : index
    %c0_4 = arith.constant 0 : index
    %2 = memref.load %arg3[%c0_3, %c0_4] : memref<1x1xf32, #tpu.memory_space<smem>>
    %c0_5 = arith.constant 0 : index
    %c0_6 = arith.constant 0 : index
    %3 = vector.load %arg4[%c0_5, %c0_6] : memref<8x1xf32, #tpu.memory_space<vmem>>, vector<8x1xf32>
    %cst = arith.constant dense<0.000000e+00> : vector<8x1xf32>
    %4 = tpu.matmul %0, %1, %cst {dimension_numbers = #tpu.dot_dimension_numbers<[1], [0], [0], [1], [0, 0, 1, 1], [], []>} : vector<8x32xf32>, vector<32x1xf32>, vector<8x1xf32> -> vector<8x1xf32>
    %5 = vector.broadcast %2 : f32 to vector<8x1xf32>
    %6 = arith.addf %4, %5 : vector<8x1xf32>
    %7 = math.absf %6 : vector<8x1xf32>
    %cst_7 = arith.constant 0.000000e+00 : f32
    %8 = vector.broadcast %cst_7 : f32 to vector<8x1xf32>
    %9 = arith.subf %8, %7 : vector<8x1xf32>
    %10 = math.exp %9 : vector<8x1xf32>
    %cst_8 = arith.constant 0.000000e+00 : f32
    %11 = vector.broadcast %cst_8 : f32 to vector<8x1xf32>
    %12 = arith.cmpf oge, %6, %11 : vector<8x1xf32>
    %cst_9 = arith.constant 1.000000e+00 : f32
    %13 = vector.broadcast %cst_9 : f32 to vector<8x1xf32>
    %14 = arith.select %12, %13, %10 : vector<8x1xi1>, vector<8x1xf32>
    %cst_10 = arith.constant 1.000000e+00 : f32
    %15 = vector.broadcast %cst_10 : f32 to vector<8x1xf32>
    %16 = arith.addf %15, %10 : vector<8x1xf32>
    %17 = arith.divf %14, %16 : vector<8x1xf32>
    %c0_11 = arith.constant 0 : index
    %c0_12 = arith.constant 0 : index
    %18 = vector.load %arg5[%c0_11, %c0_12] : memref<8x1xf32, #tpu.memory_space<vmem>>, vector<8x1xf32>
    tpu.vector_store %arg5[%c0_11, %c0_12], %17 {strides = array<i32>} : memref<8x1xf32, #tpu.memory_space<vmem>>, vector<8x1xf32>,
    %cst_13 = arith.constant 0.000000e+00 : f32
    %19 = vector.broadcast %cst_13 : f32 to vector<8x1xf32>
    %20 = arith.maximumf %6, %19 : vector<8x1xf32>
    %cst_14 = arith.constant 1.000000e+00 : f32
    %21 = vector.broadcast %cst_14 : f32 to vector<8x1xf32>
    %22 = arith.addf %21, %10 : vector<8x1xf32>
    %23 = math.log %22 : vector<8x1xf32>
    %24 = arith.addf %20, %23 : vector<8x1xf32>
    %25 = arith.subf %24, %6 : vector<8x1xf32>
    %cst_15 = arith.constant 0.000000e+00 : f32
    %26 = vector.broadcast %cst_15 : f32 to vector<8x1xf32>
    %27 = arith.subf %26, %25 : vector<8x1xf32>
    %cst_16 = arith.constant -1.000000e+02 : f32
    %28 = vector.broadcast %cst_16 : f32 to vector<8x1xf32>
    %29 = arith.maximumf %27, %28 : vector<8x1xf32>
    %cst_17 = arith.constant 0.000000e+00 : f32
    %30 = vector.broadcast %cst_17 : f32 to vector<8x1xf32>
    %31 = arith.subf %30, %24 : vector<8x1xf32>
    %cst_18 = arith.constant -1.000000e+02 : f32
    %32 = vector.broadcast %cst_18 : f32 to vector<8x1xf32>
    %33 = arith.maximumf %31, %32 : vector<8x1xf32>
    %34 = arith.mulf %3, %29 : vector<8x1xf32>
    %cst_19 = arith.constant 1.000000e+00 : f32
    %35 = vector.broadcast %cst_19 : f32 to vector<8x1xf32>
    %36 = arith.subf %35, %3 : vector<8x1xf32>
    %37 = arith.mulf %36, %33 : vector<8x1xf32>
    %38 = arith.addf %34, %37 : vector<8x1xf32>
    %cst_20 = arith.constant 0.000000e+00 : f32
    %39 = vector.broadcast %cst_20 : f32 to vector<8x1xf32>
    %40 = arith.subf %39, %38 : vector<8x1xf32>
    %c0_21 = arith.constant 0 : index
    %c0_22 = arith.constant 0 : index
    %41 = vector.load %arg6[%c0_21, %c0_22] : memref<8x1xf32, #tpu.memory_space<vmem>>, vector<8x1xf32>
    tpu.vector_store %arg6[%c0_21, %c0_22], %40 {strides = array<i32>} : memref<8x1xf32, #tpu.memory_space<vmem>>, vector<8x1xf32>,
    return
  }
  func.func @transform_0(%arg0: i32) -> (i32, i32) {
    %c0_i32 = arith.constant 0 : i32
    %c0_i32_0 = arith.constant 0 : i32
    return %arg0, %c0_i32 : i32, i32
  }
  func.func @transform_1(%arg0: i32) -> (i32, i32) {
    %c0_i32 = arith.constant 0 : i32
    %c0_i32_0 = arith.constant 0 : i32
    %c0_i32_1 = arith.constant 0 : i32
    return %c0_i32, %c0_i32_0 : i32, i32
  }
  func.func @transform_2(%arg0: i32) -> (i32, i32) {
    %c0_i32 = arith.constant 0 : i32
    %c0_i32_0 = arith.constant 0 : i32
    %c0_i32_1 = arith.constant 0 : i32
    return %c0_i32, %c0_i32_0 : i32, i32
  }
  func.func @transform_3(%arg0: i32) -> (i32, i32) {
    %c0_i32 = arith.constant 0 : i32
    %c0_i32_0 = arith.constant 0 : i32
    return %arg0, %c0_i32 : i32, i32
  }
  func.func @transform_4(%arg0: i32) -> (i32, i32) {
    %c0_i32 = arith.constant 0 : i32
    %c0_i32_0 = arith.constant 0 : i32
    return %arg0, %c0_i32 : i32, i32
  }
  func.func @transform_5(%arg0: i32) -> (i32, i32) {
    %c0_i32 = arith.constant 0 : i32
    %c0_i32_0 = arith.constant 0 : i32
    return %arg0, %c0_i32 : i32, i32
  }
}

</mosaic_0001>

<llo_original>
// kernel: tpu_custom_call.1
$region0: #{tpu_custom_call.1}
  #allocation0 [shape = 'u32[]', space=smem, size = 0x4, offset = 0x4, fixed_abs, tag = 'smem constant byte address 0x4 - core index']
  #allocation1 [shape = 'u32[144,128]{1,0:T(1,128)}', space=vmem, size = 0x12000, scoped, tag = 'internal scratch']
  #allocation2 [shape = 'f32[1,1]{1,0:T(1,128)S(6)}', space=smem, size = 0x200, scoped, tag = 'scoped memory for tpu_custom_call.1']
  %s0 = inlined_call_operand.vmem [shape: f32[8,32], index: 0, kind: input, shape index: {}]
  %s1 = inlined_call_operand.vmem [shape: f32[32,1], index: 1, kind: input, shape index: {}]
  %s2 = inlined_call_operand.<no memory space> [shape: f32[1,1], index: 2, kind: input, shape index: {}]
  %s3 = inlined_call_operand.vmem [shape: f32[8,1], index: 3, kind: input, shape index: {}]
  %s4 = inlined_call_operand.vmem [shape: f32[8,1], index: 4, kind: output, shape index: {0}]
  %s5 = inlined_call_operand.vmem [shape: f32[8,1], index: 5, kind: output, shape index: {1}]
  %6 = xla_tuple %s4, %s5
  %s7 = sld [smem:[#allocation0]]
  $region34: #{tpu_custom_call.1} parent=0
    _
  %s9 = ssub.s32 1, %s7
  %s10 = scalar_select 0, %s9, %s7
  %11 = sst [smem:[#allocation2]] %s2
  // Predicated region
  $region2: #{tpu_custom_call.1} parent=0 // pred_check
    _
  $region3: #{tpu_custom_call.1} parent=0 // pred_check_branch
    %13 = sbr.rel (0) target = $region5
  $region4: #{tpu_custom_call.1} parent=0 // pred_region
    _
  $region5: #{tpu_custom_call.1} parent=0 // pred_fallthru
    _
  // Predicated region
  $region6: #{tpu_custom_call.1} parent=0 // pred_check
    _
  $region7: #{tpu_custom_call.1} parent=0 // pred_check_branch
    %15 = sbr.rel (0) target = $region9
  $region8: #{tpu_custom_call.1} parent=0 // pred_region
    _
  $region9: #{tpu_custom_call.1} parent=0 // pred_fallthru
    _
  // Predicated region
  $region10: #{tpu_custom_call.1} parent=0 // pred_check
    _
  $region11: #{tpu_custom_call.1} parent=0 // pred_check_branch
    %17 = sbr.rel (0) target = $region13
  $region12: #{tpu_custom_call.1} parent=0 // pred_region
    _
  $region13: #{tpu_custom_call.1} parent=0 // pred_fallthru
    _
  // Predicated region
  $region14: #{tpu_custom_call.1} parent=0 // pred_check
    _
  $region15: #{tpu_custom_call.1} parent=0 // pred_check_branch
    %19 = sbr.rel (0) target = $region17
  $region16: #{tpu_custom_call.1} parent=0 // pred_region
    _
  $region17: #{tpu_custom_call.1} parent=0 // pred_fallthru
    _
  %v20 = vld [vmem:[%s0] sm:$0xff]
  %v21 = vld [vmem:[%s1] sm:$0xff]
  %v22 = vld [vmem:[%s1 + $0x8] sm:$0xff]
  %v23 = vld [vmem:[%s1 + $0x10] sm:$0xff]
  %v24 = vld [vmem:[%s1 + $0x18] sm:$0xff]
  %s25 = sld [smem:[#allocation2]]
  %v26 = vld [vmem:[%s3] sm:$0xff]
  %v27 = vstv %s25
  %vm28 = vcmask 261120
  %v30 = vsel %vm28, %v20, 0
  %32 = vmatprep.subr.mxu0 0.0
  %33 = vmatpush1.msra.mxu0 0.0
  %34 = vmatprep.subr.mxu0 0.0
  %35 = vmatpush1.msra.mxu0 0.0
  %36 = vmatprep.subr.mxu0 0.0
  %37 = vmatpush1.msra.mxu0 0.0
  %38 = vmatprep.subr.mxu0 0.0
  %39 = vmatpush1.msra.mxu0 0.0
  %40 = vmatprep.subr.mxu0 0.0
  %41 = vmatpush1.msra.mxu0 0.0
  %42 = vmatprep.subr.mxu0 0.0
  %43 = vmatpush1.msra.mxu0 0.0
  %44 = vmatprep.subr.mxu0 0.0
  %45 = vmatpush1.msra.mxu0 0.0
  %46 = vmatprep.subr.mxu0 0.0
  %47 = vmatpush1.msra.mxu0 0.0
  %48 = vmatprep.subr.mxu0 0.0
  %49 = vmatpush1.msra.mxu0 0.0
  %50 = vmatprep.subr.mxu0 0.0
  %51 = vmatpush1.msra.mxu0 0.0
  %52 = vmatprep.subr.mxu0 0.0
  %53 = vmatpush1.msra.mxu0 0.0
  %54 = vmatprep.subr.mxu0 0.0
  %55 = vmatpush1.msra.mxu0 0.0
  %56 = vmatprep.subr.mxu0 0.0
  %57 = vmatpush1.msra.mxu0 %v24
  %58 = vmatprep.subr.mxu0 0.0
  %59 = vmatpush1.msra.mxu0 %v23
  %60 = vmatprep.subr.mxu0 0.0
  %61 = vmatpush1.msra.mxu0 %v22
  %62 = vmatprep.subr.mxu0 0.0
  %63 = vmatpush1.msra.mxu0 %v21
  %64 = vmatprep.subr.mxu0 0.0
  %65 = vmatpush2.msra.mxu0 0.0
  %66 = vmatprep.subr.mxu0 0.0
  %67 = vmatpush2.msra.mxu0 0.0
  %68 = vmatprep.subr.mxu0 0.0
  %69 = vmatpush2.msra.mxu0 0.0
  %70 = vmatprep.subr.mxu0 0.0
  %71 = vmatpush2.msra.mxu0 0.0
  %72 = vmatprep.subr.mxu0 0.0
  %73 = vmatpush2.msra.mxu0 0.0
  %74 = vmatprep.subr.mxu0 0.0
  %75 = vmatpush2.msra.mxu0 0.0
  %76 = vmatprep.subr.mxu0 0.0
  %77 = vmatpush2.msra.mxu0 0.0
  %78 = vmatprep.subr.mxu0 0.0
  %79 = vmatpush2.msra.mxu0 0.0
  %80 = vmatprep.subr.mxu0 0.0
  %81 = vmatpush2.msra.mxu0 0.0
  %82 = vmatprep.subr.mxu0 0.0
  %83 = vmatpush2.msra.mxu0 0.0
  %84 = vmatprep.subr.mxu0 0.0
  %85 = vmatpush2.msra.mxu0 0.0
  %86 = vmatprep.subr.mxu0 0.0
  %87 = vmatpush2.msra.mxu0 0.0
  %88 = vmatprep.subr.mxu0 0.0
  %89 = vmatpush2.msra.mxu0 0.0
  %90 = vmatprep.subr.mxu0 0.0
  %91 = vmatpush2.msra.mxu0 0.0
  %92 = vmatprep.subr.mxu0 0.0
  %93 = vmatpush2.msra.mxu0 0.0
  %94 = vmatprep.subr.mxu0 0.0
  %95 = vmatpush2.msra.mxu0 0.0
  %96 = vmatprep.mubr.f32.mxu0 0.0
  %97 = vmatmul.mubr.f32.gmra.mxu0 %v30
  %v98 = vpop.f32.mrf.mxu0
  %v99 = vadd.f32 %v27, %v98
  %v100 = vpop.f32.mrf.mxu0
  %101 = vdwg.mxu0
  %v102 = vand.u32 2147483647, %v99
  %v103 = vsub.f32 0.0, %v102
  %v104 = vmul.f32 %v103, 1.442695
  %v105 = vpow.pop %v104
  %vm106 = vcmp.ge.f32.partialorder %v99, 0.0
  %v107 = vsel %vm106, 1.0, %v105
  %v108 = vadd.f32 %v105, 1.0
  %v109 = vrcp.pop %v108
  %v110 = vmul.f32 %v107, %v109
  %vm111 = vcmask 7168
  %112 = vst.msk [vmem:[%s4] sm:$0xff] %vm111, %v110
  %v113 = vmax.f32 %v99, 0.0
  %v114 = vlog2.pop %v108
  %v115 = vmul.f32 %v114, 0.6931472
  %v116 = vadd.f32 %v113, %v115
  %v117 = vsub.f32 %v116, %v99
  %v118 = vsub.f32 0.0, %v117
  %v119 = vmax.f32 %v118, -100.0
  %v120 = vsub.f32 0.0, %v116
  %v121 = vmax.f32 %v120, -100.0
  %v122 = vmul.f32 %v26, %v119
  %v123 = vsub.f32 1.0, %v26
  %v124 = vmul.f32 %v123, %v121
  %v125 = vadd.f32 %v122, %v124
  %v126 = vsub.f32 0.0, %v125
  %127 = vst.msk [vmem:[%s5] sm:$0xff] %vm111, %v126
  // Predicated region
  $region18: #{tpu_custom_call.1} parent=0 // pred_check
    _
  $region19: #{tpu_custom_call.1} parent=0 // pred_check_branch
    %129 = sbr.rel (0) target = $region21
  $region20: #{tpu_custom_call.1} parent=0 // pred_region
    _
  $region21: #{tpu_custom_call.1} parent=0 // pred_fallthru
    _
  // Predicated region
  $region22: #{tpu_custom_call.1} parent=0 // pred_check
    _
  $region23: #{tpu_custom_call.1} parent=0 // pred_check_branch
    %131 = sbr.rel (0) target = $region25
  $region24: #{tpu_custom_call.1} parent=0 // pred_region
    _
  $region25: #{tpu_custom_call.1} parent=0 // pred_fallthru
    _
  // Predicated region
  $region26: #{tpu_custom_call.1} parent=0 // pred_check
    _
  $region27: #{tpu_custom_call.1} parent=0 // pred_check_branch
    %133 = sbr.rel (0) target = $region29
  $region28: #{tpu_custom_call.1} parent=0 // pred_region
    _
  $region29: #{tpu_custom_call.1} parent=0 // pred_fallthru
    _
  // Predicated region
  $region30: #{tpu_custom_call.1} parent=0 // pred_check
    _
  $region31: #{tpu_custom_call.1} parent=0 // pred_check_branch
    %135 = sbr.rel (0) target = $region33
  $region32: #{tpu_custom_call.1} parent=0 // pred_region
    _
  $region33: #{tpu_custom_call.1} parent=0 // pred_fallthru
    _

</llo_original>
